<compile_context>
chip_gen: v6e
topology: v6e:2x2x1
jax: 0.10.0
libtpu: 0.0.40
codegen_flags: <defaults>
</compile_context>

<pallas_src>
import functools

import jax
import jax.numpy as jnp
from jax import lax
from jax.experimental import pallas as pl
from jax.experimental.pallas import tpu as pltpu

HID = 64  # hidden width from the module


def mlp_kernel(x_ref, w1_ref, b1_ref, w2_ref, b2_ref, w3_ref, b3_ref, o_ref,
               *, chunk, bf16_mxu):
    # Grid-resident parameters (constant index_map -> fetched once).
    w1 = w1_ref[...]                      # (64, 1)
    b1 = b1_ref[...]                      # (64, 1)
    w2 = w2_ref[...]                      # (64, 64)
    if bf16_mxu:
        w2 = w2.astype(jnp.bfloat16)
    b2 = b2_ref[...]                      # (64, 1)
    w3 = w3_ref[...]                      # (64, 1)
    b3 = b3_ref[0, 0]                     # scalar, lives in SMEM

    tb = x_ref.shape[1]                   # static block width (lanes)
    n_chunks = tb // chunk                # static

    def body(c, carry):
        j = pl.multiple_of(c * chunk, chunk)
        x = x_ref[:, pl.ds(j, chunk)]                          # (1, chunk)

        # fc1 + ReLU: K=1 "matmul" as a VPU outer product.
        h1 = jnp.maximum(w1 * x + b1, 0.0)                     # (64, chunk) f32

        # fc2 + ReLU: the only real matmul (64x64 contraction) -> MXU.
        lhs = h1.astype(jnp.bfloat16) if bf16_mxu else h1
        h2 = jnp.dot(w2, lhs, preferred_element_type=jnp.float32) + b2
        h2 = jnp.maximum(h2, 0.0)                              # (64, chunk) f32

        # fc3: N=1 matmul as VPU multiply + sublane (XLU) reduction.
        out = jnp.sum(h2 * w3, axis=0, keepdims=True) + b3     # (1, chunk)
        o_ref[:, pl.ds(j, chunk)] = out.astype(o_ref.dtype)
        return carry

    # Unrolled so the LLO scheduler can overlap VPU/XLU work with MXU pushes
    # and so per-chunk live ranges stay bounded (no vreg spills).
    lax.fori_loop(0, n_chunks, body, 0, unroll=True)


def polinomio_forward(x, params, *, tb=1024, chunk=256, bf16_mxu=False):
    """x: (N, 1) float32 (PyTorch convention). Returns (N, 1) float32.

    Relayouts to (1, N) so the batch maps to lanes. No explicit padding: the
    last (possibly partial) block is handled by Pallas' masked writeback.
    """
    assert chunk % 128 == 0, "chunk must be a multiple of the 128-lane width"
    assert tb % chunk == 0, "tb must be a multiple of chunk"

    N = x.shape[0]
    # Shrink the tile for tiny batches (still a multiple of chunk / 128 lanes).
    tb_eff = min(tb, chunk * pl.cdiv(N, chunk))
    n_tiles = pl.cdiv(N, tb_eff)

    x_row = x.reshape(1, N).astype(jnp.float32)   # free relayout (no HBM copy)

    w1, b1 = params["w1"], params["b1"]  # (64, 1), (64, 1)
    w2, b2 = params["w2"], params["b2"]  # (64, 64), (64, 1)
    w3, b3 = params["w3"], params["b3"]  # (64, 1),  (1, 1)

    # Grid-resident weights/biases: constant block index -> DMA'd only once.
    const_spec = lambda shape: pl.BlockSpec(shape, lambda i: (0, 0))

    kernel = functools.partial(mlp_kernel, chunk=chunk, bf16_mxu=bf16_mxu)

    out_row = pl.pallas_call(
        kernel,
        out_shape=jax.ShapeDtypeStruct((1, N), jnp.float32),
        grid_spec=pltpu.PrefetchScalarGridSpec(
            num_scalar_prefetch=0,
            grid=(n_tiles,),
            in_specs=[
                pl.BlockSpec((1, tb_eff), lambda i: (0, i)),   # x (batch on lanes)
                const_spec(w1.shape),
                const_spec(b1.shape),
                const_spec(w2.shape),
                const_spec(b2.shape),
                const_spec(w3.shape),
                pl.BlockSpec(memory_space=pltpu.MemorySpace.SMEM),  # b3 scalar
            ],
            out_specs=pl.BlockSpec((1, tb_eff), lambda i: (0, i)),  # lane-dense out
        ),
        compiler_params=pltpu.CompilerParams(
            dimension_semantics=("parallel",),  # shards across TCs when grid >= 2
        ),
    )(x_row, w1, b1, w2, b2, w3, b3)

    return out_row.reshape(N, 1)


def init_params(key):
    """Deterministic init mimicking nn.Linear's U(-1/sqrt(fan_in), 1/sqrt(fan_in)).

    Stored in the transposed-activation layout used by the kernel:
      w1: (64, 1)  = fc1.weight          b1: (64, 1) = fc1.bias[:, None]
      w2: (64, 64) = fc2.weight (out,in) b2: (64, 1) = fc2.bias[:, None]
      w3: (64, 1)  = fc3.weight.T        b3: (1, 1)  = fc3.bias
    """
    k1, k2, k3, k4, k5, k6 = jax.random.split(key, 6)

    def uni(k, shape, fan_in):
        bound = 1.0 / jnp.sqrt(fan_in)
        return jax.random.uniform(k, shape, jnp.float32, -bound, bound)

    w1 = uni(k1, (HID, 1), 1.0)
    b1 = uni(k2, (HID, 1), 1.0)
    w2 = uni(k3, (HID, HID), float(HID))
    b2 = uni(k4, (HID, 1), float(HID))
    w3 = uni(k5, (HID, 1), float(HID))
    b3 = uni(k6, (1, 1), float(HID))
    return {"w1": w1, "b1": b1, "w2": w2, "b2": b2, "w3": w3, "b3": b3}


def reference_forward(x, p):
    """Plain-JAX reference in the standard (N, features) layout."""
    h1 = jnp.maximum(x @ p["w1"].T + p["b1"].T, 0.0)   # (N, 64)
    h2 = jnp.maximum(h1 @ p["w2"].T + p["b2"].T, 0.0)  # (N, 64)
    return h2 @ p["w3"] + p["b3"]                       # (N, 1)


if __name__ == "__main__":
    key = jax.random.PRNGKey(0)
    kx, kp = jax.random.split(key)

    # Batch of scalar inputs (Linear(1, ...) semantics). N deliberately NOT a
    # multiple of the chunk/tile: exercises the ragged-last-block path. The
    # whole batch fits in one grid step (tb=1024), so there is no per-step
    # overhead and no cross-TC split of sub-microsecond work.
    N = 1000
    x = jax.random.normal(kx, (N, 1), jnp.float32)
    params = init_params(kp)

    fwd = jax.jit(functools.partial(polinomio_forward, tb=1024, chunk=256))
    out = jax.block_until_ready(fwd(x, params))

    ref = reference_forward(x, params)
    assert out.shape == (N, 1)
    assert jnp.allclose(out, ref, atol=1e-5, rtol=1e-5), float(
        jnp.max(jnp.abs(out - ref)))

    print("KERNEL_OK")
</pallas_src>

<mosaic_0001>
module attributes {stable_mosaic.version = 11 : i64} {
  func.func @mlp_kernel(%arg0: i32, %arg1: memref<1x1024xf32, #tpu.memory_space<vmem>>, %arg2: memref<64x1xf32, #tpu.memory_space<vmem>>, %arg3: memref<64x1xf32, #tpu.memory_space<vmem>>, %arg4: memref<64x64xf32, #tpu.memory_space<vmem>>, %arg5: memref<64x1xf32, #tpu.memory_space<vmem>>, %arg6: memref<64x1xf32, #tpu.memory_space<vmem>>, %arg7: memref<1x1xf32, #tpu.memory_space<smem>>, %arg8: memref<1x1024xf32, #tpu.memory_space<vmem>>) attributes {dimension_semantics = [#tpu.dimension_semantics<parallel>], iteration_bounds = array<i64: 1>, scalar_prefetch = 0 : i64, scratch_operands = 0 : i64, tpu.core_type = #tpu.core_type<tc>, window_params = [{transform_indices = @transform_0, window_bounds = array<i64: 1, 1024>}, {pipeline_mode = #tpu.pipeline_mode<synchronous>, transform_indices = @transform_1, window_bounds = array<i64: 64, 1>}, {pipeline_mode = #tpu.pipeline_mode<synchronous>, transform_indices = @transform_2, window_bounds = array<i64: 64, 1>}, {pipeline_mode = #tpu.pipeline_mode<synchronous>, transform_indices = @transform_3, window_bounds = array<i64: 64, 64>}, {pipeline_mode = #tpu.pipeline_mode<synchronous>, transform_indices = @transform_4, window_bounds = array<i64: 64, 1>}, {pipeline_mode = #tpu.pipeline_mode<synchronous>, transform_indices = @transform_5, window_bounds = array<i64: 64, 1>}, {transform_indices = @transform_6, window_bounds = array<i64: 1, 1>}, {transform_indices = @transform_7, window_bounds = array<i64: 1, 1024>}]} {
    %c0 = arith.constant 0 : index
    %c0_0 = arith.constant 0 : index
    %0 = vector.load %arg2[%c0, %c0_0] : memref<64x1xf32, #tpu.memory_space<vmem>>, vector<64x1xf32>
    %c0_1 = arith.constant 0 : index
    %c0_2 = arith.constant 0 : index
    %1 = vector.load %arg3[%c0_1, %c0_2] : memref<64x1xf32, #tpu.memory_space<vmem>>, vector<64x1xf32>
    %c0_3 = arith.constant 0 : index
    %c0_4 = arith.constant 0 : index
    %2 = vector.load %arg4[%c0_3, %c0_4] : memref<64x64xf32, #tpu.memory_space<vmem>>, vector<64x64xf32>
    %c0_5 = arith.constant 0 : index
    %c0_6 = arith.constant 0 : index
    %3 = vector.load %arg5[%c0_5, %c0_6] : memref<64x1xf32, #tpu.memory_space<vmem>>, vector<64x1xf32>
    %c0_7 = arith.constant 0 : index
    %c0_8 = arith.constant 0 : index
    %4 = vector.load %arg6[%c0_7, %c0_8] : memref<64x1xf32, #tpu.memory_space<vmem>>, vector<64x1xf32>
    %c0_9 = arith.constant 0 : index
    %c0_10 = arith.constant 0 : index
    %5 = memref.load %arg7[%c0_9, %c0_10] : memref<1x1xf32, #tpu.memory_space<smem>>
    %c0_i32 = arith.constant 0 : i32
    %c256_i32 = arith.constant 256 : i32
    %6 = arith.muli %c0_i32, %c256_i32 : i32
    %7 = tpu.assume_multiple %6, 256 : i32
    %c0_11 = arith.constant 0 : index
    %8 = arith.index_cast %7 : i32 to index
    %9 = vector.load %arg1[%c0_11, %8] : memref<1x1024xf32, #tpu.memory_space<vmem>>, vector<1x256xf32>
    %10 = vector.broadcast %0 : vector<64x1xf32> to vector<64x256xf32>
    %11 = vector.broadcast %9 : vector<1x256xf32> to vector<64x256xf32>
    %12 = arith.mulf %10, %11 : vector<64x256xf32>
    %13 = vector.broadcast %1 : vector<64x1xf32> to vector<64x256xf32>
    %14 = arith.addf %12, %13 : vector<64x256xf32>
    %cst = arith.constant 0.000000e+00 : f32
    %15 = vector.broadcast %cst : f32 to vector<64x256xf32>
    %16 = arith.maximumf %14, %15 : vector<64x256xf32>
    %cst_12 = arith.constant dense<0.000000e+00> : vector<64x256xf32>
    %17 = tpu.matmul %2, %16, %cst_12 {dimension_numbers = #tpu.dot_dimension_numbers<[1], [0], [0], [1], [0, 0, 1, 1], [], []>} : vector<64x64xf32>, vector<64x256xf32>, vector<64x256xf32> -> vector<64x256xf32>
    %18 = vector.broadcast %3 : vector<64x1xf32> to vector<64x256xf32>
    %19 = arith.addf %17, %18 : vector<64x256xf32>
    %cst_13 = arith.constant 0.000000e+00 : f32
    %20 = vector.broadcast %cst_13 : f32 to vector<64x256xf32>
    %21 = arith.maximumf %19, %20 : vector<64x256xf32>
    %22 = vector.broadcast %4 : vector<64x1xf32> to vector<64x256xf32>
    %23 = arith.mulf %21, %22 : vector<64x256xf32>
    %cst_14 = arith.constant dense<0.000000e+00> : vector<256xf32>
    %24 = vector.multi_reduction <add>, %23, %cst_14 [0] : vector<64x256xf32> to vector<256xf32>
    %25 = vector.shape_cast %24 : vector<256xf32> to vector<1x256xf32>
    %26 = vector.broadcast %5 : f32 to vector<1x256xf32>
    %27 = arith.addf %25, %26 : vector<1x256xf32>
    %c0_15 = arith.constant 0 : index
    %28 = arith.index_cast %7 : i32 to index
    %29 = vector.load %arg8[%c0_15, %28] : memref<1x1024xf32, #tpu.memory_space<vmem>>, vector<1x256xf32>
    tpu.vector_store %arg8[%c0_15, %28], %27 {strides = array<i32>} : memref<1x1024xf32, #tpu.memory_space<vmem>>, vector<1x256xf32>,
    %c1_i32 = arith.constant 1 : i32
    %c256_i32_16 = arith.constant 256 : i32
    %30 = arith.muli %c1_i32, %c256_i32_16 : i32
    %31 = tpu.assume_multiple %30, 256 : i32
    %c0_17 = arith.constant 0 : index
    %32 = arith.index_cast %31 : i32 to index
    %33 = vector.load %arg1[%c0_17, %32] : memref<1x1024xf32, #tpu.memory_space<vmem>>, vector<1x256xf32>
    %34 = vector.broadcast %0 : vector<64x1xf32> to vector<64x256xf32>
    %35 = vector.broadcast %33 : vector<1x256xf32> to vector<64x256xf32>
    %36 = arith.mulf %34, %35 : vector<64x256xf32>
    %37 = vector.broadcast %1 : vector<64x1xf32> to vector<64x256xf32>
    %38 = arith.addf %36, %37 : vector<64x256xf32>
    %cst_18 = arith.constant 0.000000e+00 : f32
    %39 = vector.broadcast %cst_18 : f32 to vector<64x256xf32>
    %40 = arith.maximumf %38, %39 : vector<64x256xf32>
    %cst_19 = arith.constant dense<0.000000e+00> : vector<64x256xf32>
    %41 = tpu.matmul %2, %40, %cst_19 {dimension_numbers = #tpu.dot_dimension_numbers<[1], [0], [0], [1], [0, 0, 1, 1], [], []>} : vector<64x64xf32>, vector<64x256xf32>, vector<64x256xf32> -> vector<64x256xf32>
    %42 = vector.broadcast %3 : vector<64x1xf32> to vector<64x256xf32>
    %43 = arith.addf %41, %42 : vector<64x256xf32>
    %cst_20 = arith.constant 0.000000e+00 : f32
    %44 = vector.broadcast %cst_20 : f32 to vector<64x256xf32>
    %45 = arith.maximumf %43, %44 : vector<64x256xf32>
    %46 = vector.broadcast %4 : vector<64x1xf32> to vector<64x256xf32>
    %47 = arith.mulf %45, %46 : vector<64x256xf32>
    %cst_21 = arith.constant dense<0.000000e+00> : vector<256xf32>
    %48 = vector.multi_reduction <add>, %47, %cst_21 [0] : vector<64x256xf32> to vector<256xf32>
    %49 = vector.shape_cast %48 : vector<256xf32> to vector<1x256xf32>
    %50 = vector.broadcast %5 : f32 to vector<1x256xf32>
    %51 = arith.addf %49, %50 : vector<1x256xf32>
    %c0_22 = arith.constant 0 : index
    %52 = arith.index_cast %31 : i32 to index
    %53 = vector.load %arg8[%c0_22, %52] : memref<1x1024xf32, #tpu.memory_space<vmem>>, vector<1x256xf32>
    tpu.vector_store %arg8[%c0_22, %52], %51 {strides = array<i32>} : memref<1x1024xf32, #tpu.memory_space<vmem>>, vector<1x256xf32>,
    %c2_i32 = arith.constant 2 : i32
    %c256_i32_23 = arith.constant 256 : i32
    %54 = arith.muli %c2_i32, %c256_i32_23 : i32
    %55 = tpu.assume_multiple %54, 256 : i32
    %c0_24 = arith.constant 0 : index
    %56 = arith.index_cast %55 : i32 to index
    %57 = vector.load %arg1[%c0_24, %56] : memref<1x1024xf32, #tpu.memory_space<vmem>>, vector<1x256xf32>
    %58 = vector.broadcast %0 : vector<64x1xf32> to vector<64x256xf32>
    %59 = vector.broadcast %57 : vector<1x256xf32> to vector<64x256xf32>
    %60 = arith.mulf %58, %59 : vector<64x256xf32>
    %61 = vector.broadcast %1 : vector<64x1xf32> to vector<64x256xf32>
    %62 = arith.addf %60, %61 : vector<64x256xf32>
    %cst_25 = arith.constant 0.000000e+00 : f32
    %63 = vector.broadcast %cst_25 : f32 to vector<64x256xf32>
    %64 = arith.maximumf %62, %63 : vector<64x256xf32>
    %cst_26 = arith.constant dense<0.000000e+00> : vector<64x256xf32>
    %65 = tpu.matmul %2, %64, %cst_26 {dimension_numbers = #tpu.dot_dimension_numbers<[1], [0], [0], [1], [0, 0, 1, 1], [], []>} : vector<64x64xf32>, vector<64x256xf32>, vector<64x256xf32> -> vector<64x256xf32>
    %66 = vector.broadcast %3 : vector<64x1xf32> to vector<64x256xf32>
    %67 = arith.addf %65, %66 : vector<64x256xf32>
    %cst_27 = arith.constant 0.000000e+00 : f32
    %68 = vector.broadcast %cst_27 : f32 to vector<64x256xf32>
    %69 = arith.maximumf %67, %68 : vector<64x256xf32>
    %70 = vector.broadcast %4 : vector<64x1xf32> to vector<64x256xf32>
    %71 = arith.mulf %69, %70 : vector<64x256xf32>
    %cst_28 = arith.constant dense<0.000000e+00> : vector<256xf32>
    %72 = vector.multi_reduction <add>, %71, %cst_28 [0] : vector<64x256xf32> to vector<256xf32>
    %73 = vector.shape_cast %72 : vector<256xf32> to vector<1x256xf32>
    %74 = vector.broadcast %5 : f32 to vector<1x256xf32>
    %75 = arith.addf %73, %74 : vector<1x256xf32>
    %c0_29 = arith.constant 0 : index
    %76 = arith.index_cast %55 : i32 to index
    %77 = vector.load %arg8[%c0_29, %76] : memref<1x1024xf32, #tpu.memory_space<vmem>>, vector<1x256xf32>
    tpu.vector_store %arg8[%c0_29, %76], %75 {strides = array<i32>} : memref<1x1024xf32, #tpu.memory_space<vmem>>, vector<1x256xf32>,
    %c3_i32 = arith.constant 3 : i32
    %c256_i32_30 = arith.constant 256 : i32
    %78 = arith.muli %c3_i32, %c256_i32_30 : i32
    %79 = tpu.assume_multiple %78, 256 : i32
    %c0_31 = arith.constant 0 : index
    %80 = arith.index_cast %79 : i32 to index
    %81 = vector.load %arg1[%c0_31, %80] : memref<1x1024xf32, #tpu.memory_space<vmem>>, vector<1x256xf32>
    %82 = vector.broadcast %0 : vector<64x1xf32> to vector<64x256xf32>
    %83 = vector.broadcast %81 : vector<1x256xf32> to vector<64x256xf32>
    %84 = arith.mulf %82, %83 : vector<64x256xf32>
    %85 = vector.broadcast %1 : vector<64x1xf32> to vector<64x256xf32>
    %86 = arith.addf %84, %85 : vector<64x256xf32>
    %cst_32 = arith.constant 0.000000e+00 : f32
    %87 = vector.broadcast %cst_32 : f32 to vector<64x256xf32>
    %88 = arith.maximumf %86, %87 : vector<64x256xf32>
    %cst_33 = arith.constant dense<0.000000e+00> : vector<64x256xf32>
    %89 = tpu.matmul %2, %88, %cst_33 {dimension_numbers = #tpu.dot_dimension_numbers<[1], [0], [0], [1], [0, 0, 1, 1], [], []>} : vector<64x64xf32>, vector<64x256xf32>, vector<64x256xf32> -> vector<64x256xf32>
    %90 = vector.broadcast %3 : vector<64x1xf32> to vector<64x256xf32>
    %91 = arith.addf %89, %90 : vector<64x256xf32>
    %cst_34 = arith.constant 0.000000e+00 : f32
    %92 = vector.broadcast %cst_34 : f32 to vector<64x256xf32>
    %93 = arith.maximumf %91, %92 : vector<64x256xf32>
    %94 = vector.broadcast %4 : vector<64x1xf32> to vector<64x256xf32>
    %95 = arith.mulf %93, %94 : vector<64x256xf32>
    %cst_35 = arith.constant dense<0.000000e+00> : vector<256xf32>
    %96 = vector.multi_reduction <add>, %95, %cst_35 [0] : vector<64x256xf32> to vector<256xf32>
    %97 = vector.shape_cast %96 : vector<256xf32> to vector<1x256xf32>
    %98 = vector.broadcast %5 : f32 to vector<1x256xf32>
    %99 = arith.addf %97, %98 : vector<1x256xf32>
    %c0_36 = arith.constant 0 : index
    %100 = arith.index_cast %79 : i32 to index
    %101 = vector.load %arg8[%c0_36, %100] : memref<1x1024xf32, #tpu.memory_space<vmem>>, vector<1x256xf32>
    tpu.vector_store %arg8[%c0_36, %100], %99 {strides = array<i32>} : memref<1x1024xf32, #tpu.memory_space<vmem>>, vector<1x256xf32>,
    %c4_i32 = arith.constant 4 : i32
    return
  }
  func.func @transform_0(%arg0: i32) -> (i32, i32) {
    %c0_i32 = arith.constant 0 : i32
    %c0_i32_0 = arith.constant 0 : i32
    return %c0_i32, %arg0 : i32, i32
  }
  func.func @transform_1(%arg0: i32) -> (i32, i32) {
    %c0_i32 = arith.constant 0 : i32
    %c0_i32_0 = arith.constant 0 : i32
    %c0_i32_1 = arith.constant 0 : i32
    return %c0_i32, %c0_i32_0 : i32, i32
  }
  func.func @transform_2(%arg0: i32) -> (i32, i32) {
    %c0_i32 = arith.constant 0 : i32
    %c0_i32_0 = arith.constant 0 : i32
    %c0_i32_1 = arith.constant 0 : i32
    return %c0_i32, %c0_i32_0 : i32, i32
  }
  func.func @transform_3(%arg0: i32) -> (i32, i32) {
    %c0_i32 = arith.constant 0 : i32
    %c0_i32_0 = arith.constant 0 : i32
    %c0_i32_1 = arith.constant 0 : i32
    return %c0_i32, %c0_i32_0 : i32, i32
  }
  func.func @transform_4(%arg0: i32) -> (i32, i32) {
    %c0_i32 = arith.constant 0 : i32
    %c0_i32_0 = arith.constant 0 : i32
    %c0_i32_1 = arith.constant 0 : i32
    return %c0_i32, %c0_i32_0 : i32, i32
  }
  func.func @transform_5(%arg0: i32) -> (i32, i32) {
    %c0_i32 = arith.constant 0 : i32
    %c0_i32_0 = arith.constant 0 : i32
    %c0_i32_1 = arith.constant 0 : i32
    return %c0_i32, %c0_i32_0 : i32, i32
  }
  func.func @transform_6(%arg0: i32) -> (i32, i32) {
    %c0_i32 = arith.constant 0 : i32
    %c0_i32_0 = arith.constant 0 : i32
    %c0_i32_1 = arith.constant 0 : i32
    return %c0_i32, %c0_i32_0 : i32, i32
  }
  func.func @transform_7(%arg0: i32) -> (i32, i32) {
    %c0_i32 = arith.constant 0 : i32
    %c0_i32_0 = arith.constant 0 : i32
    return %c0_i32, %arg0 : i32, i32
  }
}

</mosaic_0001>

<llo_original>
// kernel: polinomio_forward.1
$region0: #{polinomio_forward.1}
  #allocation0 [shape = 'u32[]', space=smem, size = 0x4, offset = 0x4, fixed_abs, tag = 'smem constant byte address 0x4 - core index']
  #allocation1 [shape = 'u32[144,128]{1,0:T(1,128)}', space=vmem, size = 0x12000, scoped, tag = 'internal scratch']
  #allocation2 [shape = 'f32[1,1]{1,0:T(1,128)S(6)}', space=smem, size = 0x200, scoped, tag = 'scoped memory for polinomio_forward.1']
  %s0 = inlined_call_operand.vmem [shape: f32[1,1000], index: 0, kind: input, shape index: {}]
  %s1 = inlined_call_operand.vmem [shape: f32[64,1], index: 1, kind: input, shape index: {}]
  %s2 = inlined_call_operand.vmem [shape: f32[64,1], index: 2, kind: input, shape index: {}]
  %s3 = inlined_call_operand.vmem [shape: f32[64,64], index: 3, kind: input, shape index: {}]
  %s4 = inlined_call_operand.vmem [shape: f32[64,1], index: 4, kind: input, shape index: {}]
  %s5 = inlined_call_operand.vmem [shape: f32[64,1], index: 5, kind: input, shape index: {}]
  %s6 = inlined_call_operand.<no memory space> [shape: f32[1,1], index: 6, kind: input, shape index: {}]
  %s7 = inlined_call_operand.hbm [shape: f32[1,1000], index: 7, kind: output, shape index: {}]
  %s8 = sld [smem:[#allocation0]]
  $region38: #{polinomio_forward.1} parent=0
    _
  %s10 = ssub.s32 1, %s8
  %s11 = scalar_select 0, %s10, %s8
  %12 = sst [smem:[#allocation2]] %s6
  $region1: #{polinomio_forward.1} parent=0
    #allocation3 [shape = 'u8[4096]{0}', space=vmem, size = 0x1000, scoped, tag = 'output window, operand 0, single buffered']
    #allocation4 [shape = 's32[1]{0}', space=sflag, size = 0x4, scoped, tag = 'scoped memory for polinomio_forward.1']
    %13 = vsyncpa [#allocation4], 0
    // Predicated region
    $region2: #{polinomio_forward.1} parent=1 // pred_check
      _
    $region3: #{polinomio_forward.1} parent=1 // pred_check_branch
      %15 = sbr.rel (0) target = $region5
    $region4: #{polinomio_forward.1} parent=1 // pred_region
      _
    $region5: #{polinomio_forward.1} parent=1 // pred_fallthru
      _
    // Predicated region
    $region6: #{polinomio_forward.1} parent=1 // pred_check
      _
    $region7: #{polinomio_forward.1} parent=1 // pred_check_branch
      %17 = sbr.rel (0) target = $region9
    $region8: #{polinomio_forward.1} parent=1 // pred_region
      _
    $region9: #{polinomio_forward.1} parent=1 // pred_fallthru
      _
    // Predicated region
    $region10: #{polinomio_forward.1} parent=1 // pred_check
      _
    $region11: #{polinomio_forward.1} parent=1 // pred_check_branch
      %19 = sbr.rel (0) target = $region13
    $region12: #{polinomio_forward.1} parent=1 // pred_region
      _
    $region13: #{polinomio_forward.1} parent=1 // pred_fallthru
      _
    // Predicated region
    $region14: #{polinomio_forward.1} parent=1 // pred_check
      _
    $region15: #{polinomio_forward.1} parent=1 // pred_check_branch
      %21 = sbr.rel (0) target = $region17
    $region16: #{polinomio_forward.1} parent=1 // pred_region
      _
    $region17: #{polinomio_forward.1} parent=1 // pred_fallthru
      _
    // Predicated region
    $region18: #{polinomio_forward.1} parent=1 // pred_check
      _
    $region19: #{polinomio_forward.1} parent=1 // pred_check_branch
      %23 = sbr.rel (0) target = $region21
    $region20: #{polinomio_forward.1} parent=1 // pred_region
      _
    $region21: #{polinomio_forward.1} parent=1 // pred_fallthru
      _
    // Predicated region
    $region22: #{polinomio_forward.1} parent=1 // pred_check
      _
    $region23: #{polinomio_forward.1} parent=1 // pred_check_branch
      %25 = sbr.rel (0) target = $region25
    $region24: #{polinomio_forward.1} parent=1 // pred_region
      _
    $region25: #{polinomio_forward.1} parent=1 // pred_fallthru
      _
    // Predicated region
    $region26: #{polinomio_forward.1} parent=1 // pred_check
      _
    $region27: #{polinomio_forward.1} parent=1 // pred_check_branch
      %27 = sbr.rel (0) target = $region29
    $region28: #{polinomio_forward.1} parent=1 // pred_region
      _
    $region29: #{polinomio_forward.1} parent=1 // pred_fallthru
      _
    %v28 = vld [vmem:[%s1] sm:$0xff]
    %v29 = vld [vmem:[%s1 + $0x8] sm:$0xff]
    %v30 = vld [vmem:[%s1 + $0x10] sm:$0xff]
    %v31 = vld [vmem:[%s1 + $0x18] sm:$0xff]
    %v32 = vld [vmem:[%s1 + $0x20] sm:$0xff]
    %v33 = vld [vmem:[%s1 + $0x28] sm:$0xff]
    %v34 = vld [vmem:[%s1 + $0x30] sm:$0xff]
    %v35 = vld [vmem:[%s1 + $0x38] sm:$0xff]
    %v36 = vld [vmem:[%s2] sm:$0xff]
    %v37 = vld [vmem:[%s2 + $0x8] sm:$0xff]
    %v38 = vld [vmem:[%s2 + $0x10] sm:$0xff]
    %v39 = vld [vmem:[%s2 + $0x18] sm:$0xff]
    %v40 = vld [vmem:[%s2 + $0x20] sm:$0xff]
    %v41 = vld [vmem:[%s2 + $0x28] sm:$0xff]
    %v42 = vld [vmem:[%s2 + $0x30] sm:$0xff]
    %v43 = vld [vmem:[%s2 + $0x38] sm:$0xff]
    %v44 = vld [vmem:[%s3] sm:$0xff]
    %v45 = vld [vmem:[%s3 + $0x8] sm:$0xff]
    %v46 = vld [vmem:[%s3 + $0x10] sm:$0xff]
    %v47 = vld [vmem:[%s3 + $0x18] sm:$0xff]
    %v48 = vld [vmem:[%s3 + $0x20] sm:$0xff]
    %v49 = vld [vmem:[%s3 + $0x28] sm:$0xff]
    %v50 = vld [vmem:[%s3 + $0x30] sm:$0xff]
    %v51 = vld [vmem:[%s3 + $0x38] sm:$0xff]
    %v52 = vld [vmem:[%s4] sm:$0xff]
    %v53 = vld [vmem:[%s4 + $0x8] sm:$0xff]
    %v54 = vld [vmem:[%s4 + $0x10] sm:$0xff]
    %v55 = vld [vmem:[%s4 + $0x18] sm:$0xff]
    %v56 = vld [vmem:[%s4 + $0x20] sm:$0xff]
    %v57 = vld [vmem:[%s4 + $0x28] sm:$0xff]
    %v58 = vld [vmem:[%s4 + $0x30] sm:$0xff]
    %v59 = vld [vmem:[%s4 + $0x38] sm:$0xff]
    %v60 = vld [vmem:[%s5] sm:$0xff]
    %v61 = vld [vmem:[%s5 + $0x8] sm:$0xff]
    %v62 = vld [vmem:[%s5 + $0x10] sm:$0xff]
    %v63 = vld [vmem:[%s5 + $0x18] sm:$0xff]
    %v64 = vld [vmem:[%s5 + $0x20] sm:$0xff]
    %v65 = vld [vmem:[%s5 + $0x28] sm:$0xff]
    %v66 = vld [vmem:[%s5 + $0x30] sm:$0xff]
    %v67 = vld [vmem:[%s5 + $0x38] sm:$0xff]
    %s68 = sld [smem:[#allocation2]]
    %v69 = vld [vmem:[%s0] sm:$0x3]
    %71 = vset.pattern.permute.xlu0 0
    %72 = vperm.xlu0 %71, %v28
    %v73 = vpop.permute.xlu0 %72
    %76 = vset.pattern.permute.xlu0 0
    %77 = vperm.xlu0 %76, %v29
    %v78 = vpop.permute.xlu0 %77
    %81 = vset.pattern.permute.xlu0 0
    %82 = vperm.xlu0 %81, %v30
    %v83 = vpop.permute.xlu0 %82
    %86 = vset.pattern.permute.xlu0 0
    %87 = vperm.xlu0 %86, %v31
    %v88 = vpop.permute.xlu0 %87
    %91 = vset.pattern.permute.xlu0 0
    %92 = vperm.xlu0 %91, %v32
    %v93 = vpop.permute.xlu0 %92
    %96 = vset.pattern.permute.xlu0 0
    %97 = vperm.xlu0 %96, %v33
    %v98 = vpop.permute.xlu0 %97
    %101 = vset.pattern.permute.xlu0 0
    %102 = vperm.xlu0 %101, %v34
    %v103 = vpop.permute.xlu0 %102
    %106 = vset.pattern.permute.xlu0 0
    %107 = vperm.xlu0 %106, %v35
    %v108 = vpop.permute.xlu0 %107
    %v111 = vlaneseq
    %v112 = vshrl.u32 %v111, 7
    %v113 = vsub.s32 0, %v112
    %v114 = vrot.slane %v69, %v113
    %v115 = vlaneseq
    %v116 = vshrl.u32 %v115, 7
    %v117 = vsub.s32 1, %v116
    %v118 = vrot.slane %v69, %v117
    %v121 = vmul.f32 %v73, %v114
    %v122 = vmul.f32 %v73, %v118
    %v123 = vmul.f32 %v78, %v114
    %v124 = vmul.f32 %v78, %v118
    %v125 = vmul.f32 %v83, %v114
    %v126 = vmul.f32 %v83, %v118
    %v127 = vmul.f32 %v88, %v114
    %v128 = vmul.f32 %v88, %v118
    %v129 = vmul.f32 %v93, %v114
    %v130 = vmul.f32 %v93, %v118
    %v131 = vmul.f32 %v98, %v114
    %v132 = vmul.f32 %v98, %v118
    %v133 = vmul.f32 %v103, %v114
    %v134 = vmul.f32 %v103, %v118
    %v135 = vmul.f32 %v108, %v114
    %v136 = vmul.f32 %v108, %v118
    %138 = vset.pattern.permute.xlu0 0
    %139 = vperm.xlu0 %138, %v36
    %v140 = vpop.permute.xlu0 %139
    %143 = vset.pattern.permute.xlu0 0
    %144 = vperm.xlu0 %143, %v37
    %v145 = vpop.permute.xlu0 %144
    %148 = vset.pattern.permute.xlu0 0
    %149 = vperm.xlu0 %148, %v38
    %v150 = vpop.permute.xlu0 %149
    %153 = vset.pattern.permute.xlu0 0
    %154 = vperm.xlu0 %153, %v39
    %v155 = vpop.permute.xlu0 %154
    %158 = vset.pattern.permute.xlu0 0
    %159 = vperm.xlu0 %158, %v40
    %v160 = vpop.permute.xlu0 %159
    %163 = vset.pattern.permute.xlu0 0
    %164 = vperm.xlu0 %163, %v41
    %v165 = vpop.permute.xlu0 %164
    %168 = vset.pattern.permute.xlu0 0
    %169 = vperm.xlu0 %168, %v42
    %v170 = vpop.permute.xlu0 %169
    %173 = vset.pattern.permute.xlu0 0
    %174 = vperm.xlu0 %173, %v43
    %v175 = vpop.permute.xlu0 %174
    %v177 = vadd.f32 %v121, %v140
    %v178 = vadd.f32 %v122, %v140
    %v179 = vadd.f32 %v123, %v145
    %v180 = vadd.f32 %v124, %v145
    %v181 = vadd.f32 %v125, %v150
    %v182 = vadd.f32 %v126, %v150
    %v183 = vadd.f32 %v127, %v155
    %v184 = vadd.f32 %v128, %v155
    %v185 = vadd.f32 %v129, %v160
    %v186 = vadd.f32 %v130, %v160
    %v187 = vadd.f32 %v131, %v165
    %v188 = vadd.f32 %v132, %v165
    %v189 = vadd.f32 %v133, %v170
    %v190 = vadd.f32 %v134, %v170
    %v191 = vadd.f32 %v135, %v175
    %v192 = vadd.f32 %v136, %v175
    %v193 = vmax.f32 %v177, 0.0
    %v194 = vmax.f32 %v178, 0.0
    %v195 = vmax.f32 %v179, 0.0
    %v196 = vmax.f32 %v180, 0.0
    %v197 = vmax.f32 %v181, 0.0
    %v198 = vmax.f32 %v182, 0.0
    %v199 = vmax.f32 %v183, 0.0
    %v200 = vmax.f32 %v184, 0.0
    %v201 = vmax.f32 %v185, 0.0
    %v202 = vmax.f32 %v186, 0.0
    %v203 = vmax.f32 %v187, 0.0
    %v204 = vmax.f32 %v188, 0.0
    %v205 = vmax.f32 %v189, 0.0
    %v206 = vmax.f32 %v190, 0.0
    %v207 = vmax.f32 %v191, 0.0
    %v208 = vmax.f32 %v192, 0.0
    %210 = vset.pattern.permute.xlu0 0
    %211 = vperm.xlu0 %210, %v52
    %v212 = vpop.permute.xlu0 %211
    %215 = vset.pattern.permute.xlu0 0
    %216 = vperm.xlu0 %215, %v53
    %v217 = vpop.permute.xlu0 %216
    %220 = vset.pattern.permute.xlu0 0
    %221 = vperm.xlu0 %220, %v54
    %v222 = vpop.permute.xlu0 %221
    %225 = vset.pattern.permute.xlu0 0
    %226 = vperm.xlu0 %225, %v55
    %v227 = vpop.permute.xlu0 %226
    %230 = vset.pattern.permute.xlu0 0
    %231 = vperm.xlu0 %230, %v56
    %v232 = vpop.permute.xlu0 %231
    %235 = vset.pattern.permute.xlu0 0
    %236 = vperm.xlu0 %235, %v57
    %v237 = vpop.permute.xlu0 %236
    %240 = vset.pattern.permute.xlu0 0
    %241 = vperm.xlu0 %240, %v58
    %v242 = vpop.permute.xlu0 %241
    %245 = vset.pattern.permute.xlu0 0
    %246 = vperm.xlu0 %245, %v59
    %v247 = vpop.permute.xlu0 %246
    %vm249 = vcmask 523264
    %v251 = vsel %vm249, %v44, 0
    %v254 = vsel %vm249, %v45, 0
    %v257 = vsel %vm249, %v46, 0
    %v260 = vsel %vm249, %v47, 0
    %v263 = vsel %vm249, %v48, 0
    %v266 = vsel %vm249, %v49, 0
    %v269 = vsel %vm249, %v50, 0
    %v272 = vsel %vm249, %v51, 0
    %274 = vmatprep.subr.mxu0 0.0
    %275 = vmatpush1.msra.mxu0 0.0
    %276 = vmatprep.subr.mxu0 0.0
    %277 = vmatpush1.msra.mxu0 0.0
    %278 = vmatprep.subr.mxu0 0.0
    %279 = vmatpush1.msra.mxu0 0.0
    %280 = vmatprep.subr.mxu0 0.0
    %281 = vmatpush1.msra.mxu0 0.0
    %282 = vmatprep.subr.mxu0 0.0
    %283 = vmatpush1.msra.mxu0 0.0
    %284 = vmatprep.subr.mxu0 0.0
    %285 = vmatpush1.msra.mxu0 0.0
    %286 = vmatprep.subr.mxu0 0.0
    %287 = vmatpush1.msra.mxu0 0.0
    %288 = vmatprep.subr.mxu0 0.0
    %289 = vmatpush1.msra.mxu0 0.0
    %290 = vmatprep.subr.mxu0 %v208
    %291 = vmatpush1.msra.mxu0 %v207
    %292 = vmatprep.subr.mxu0 %v206
    %293 = vmatpush1.msra.mxu0 %v205
    %294 = vmatprep.subr.mxu0 %v204
    %295 = vmatpush1.msra.mxu0 %v203
    %296 = vmatprep.subr.mxu0 %v202
    %297 = vmatpush1.msra.mxu0 %v201
    %298 = vmatprep.subr.mxu0 %v200
    %299 = vmatpush1.msra.mxu0 %v199
    %300 = vmatprep.subr.mxu0 %v198
    %301 = vmatpush1.msra.mxu0 %v197
    %302 = vmatprep.subr.mxu0 %v196
    %303 = vmatpush1.msra.mxu0 %v195
    %304 = vmatprep.subr.mxu0 %v194
    %305 = vmatpush1.msra.mxu0 %v193
    %306 = vmatprep.subr.mxu0 0.0
    %307 = vmatpush2.msra.mxu0 0.0
    %308 = vmatprep.subr.mxu0 0.0
    %309 = vmatpush2.msra.mxu0 0.0
    %310 = vmatprep.subr.mxu0 0.0
    %311 = vmatpush2.msra.mxu0 0.0
    %312 = vmatprep.subr.mxu0 0.0
    %313 = vmatpush2.msra.mxu0 0.0
    %314 = vmatprep.subr.mxu0 0.0
    %315 = vmatpush2.msra.mxu0 0.0
    %316 = vmatprep.subr.mxu0 0.0
    %317 = vmatpush2.msra.mxu0 0.0
    %318 = vmatprep.subr.mxu0 0.0
    %319 = vmatpush2.msra.mxu0 0.0
    %320 = vmatprep.subr.mxu0 0.0
    %321 = vmatpush2.msra.mxu0 0.0
    %322 = vmatprep.subr.mxu0 0.0
    %323 = vmatpush2.msra.mxu0 0.0
    %324 = vmatprep.subr.mxu0 0.0
    %325 = vmatpush2.msra.mxu0 0.0
    %326 = vmatprep.subr.mxu0 0.0
    %327 = vmatpush2.msra.mxu0 0.0
    %328 = vmatprep.subr.mxu0 0.0
    %329 = vmatpush2.msra.mxu0 0.0
    %330 = vmatprep.subr.mxu0 0.0
    %331 = vmatpush2.msra.mxu0 0.0
    %332 = vmatprep.subr.mxu0 0.0
    %333 = vmatpush2.msra.mxu0 0.0
    %334 = vmatprep.subr.mxu0 0.0
    %335 = vmatpush2.msra.mxu0 0.0
    %336 = vmatprep.subr.mxu0 0.0
    %337 = vmatpush2.msra.mxu0 0.0
    %338 = vmatprep.mubr.f32.mxu0 0.0
    %339 = vmatmul.mubr.f32.gmra.mxu0 %v251
    %v340 = vpop.f32.mrf.mxu0
    %v341 = vadd.f32 %v212, %v340
    %v342 = vpop.f32.mrf.mxu0
    %v343 = vadd.f32 %v212, %v342
    %344 = vmatprep.mubr.f32.mxu0 0.0
    %345 = vmatmul.mubr.f32.gmra.mxu0 %v254
    %v346 = vpop.f32.mrf.mxu0
    %v347 = vadd.f32 %v217, %v346
    %v348 = vpop.f32.mrf.mxu0
    %v349 = vadd.f32 %v217, %v348
    %350 = vmatprep.mubr.f32.mxu0 0.0
    %351 = vmatmul.mubr.f32.gmra.mxu0 %v257
    %v352 = vpop.f32.mrf.mxu0
    %v353 = vadd.f32 %v222, %v352
    %v354 = vpop.f32.mrf.mxu0
    %v355 = vadd.f32 %v222, %v354
    %356 = vmatprep.mubr.f32.mxu0 0.0
    %357 = vmatmul.mubr.f32.gmra.mxu0 %v260
    %v358 = vpop.f32.mrf.mxu0
    %v359 = vadd.f32 %v227, %v358
    %v360 = vpop.f32.mrf.mxu0
    %v361 = vadd.f32 %v227, %v360
    %362 = vmatprep.mubr.f32.mxu0 0.0
    %363 = vmatmul.mubr.f32.gmra.mxu0 %v263
    %v364 = vpop.f32.mrf.mxu0
    %v365 = vadd.f32 %v232, %v364
    %v366 = vpop.f32.mrf.mxu0
    %v367 = vadd.f32 %v232, %v366
    %368 = vmatprep.mubr.f32.mxu0 0.0
    %369 = vmatmul.mubr.f32.gmra.mxu0 %v266
    %v370 = vpop.f32.mrf.mxu0
    %v371 = vadd.f32 %v237, %v370
    %v372 = vpop.f32.mrf.mxu0
    %v373 = vadd.f32 %v237, %v372
    %374 = vmatprep.mubr.f32.mxu0 0.0
    %375 = vmatmul.mubr.f32.gmra.mxu0 %v269
    %v376 = vpop.f32.mrf.mxu0
    %v377 = vadd.f32 %v242, %v376
    %v378 = vpop.f32.mrf.mxu0
    %v379 = vadd.f32 %v242, %v378
    %380 = vmatprep.mubr.f32.mxu0 0.0
    %381 = vmatmul.mubr.f32.gmra.mxu0 %v272
    %v382 = vpop.f32.mrf.mxu0
    %v383 = vadd.f32 %v247, %v382
    %v384 = vpop.f32.mrf.mxu0
    %v385 = vadd.f32 %v247, %v384
    %386 = vdwg.mxu0
    %v387 = vmax.f32 %v341, 0.0
    %v388 = vmax.f32 %v343, 0.0
    %v389 = vmax.f32 %v347, 0.0
    %v390 = vmax.f32 %v349, 0.0
    %v391 = vmax.f32 %v353, 0.0
    %v392 = vmax.f32 %v355, 0.0
    %v393 = vmax.f32 %v359, 0.0
    %v394 = vmax.f32 %v361, 0.0
    %v395 = vmax.f32 %v365, 0.0
    %v396 = vmax.f32 %v367, 0.0
    %v397 = vmax.f32 %v371, 0.0
    %v398 = vmax.f32 %v373, 0.0
    %v399 = vmax.f32 %v377, 0.0
    %v400 = vmax.f32 %v379, 0.0
    %v401 = vmax.f32 %v383, 0.0
    %v402 = vmax.f32 %v385, 0.0
    %404 = vset.pattern.permute.xlu0 0
    %405 = vperm.xlu0 %404, %v60
    %v406 = vpop.permute.xlu0 %405
    %409 = vset.pattern.permute.xlu0 0
    %410 = vperm.xlu0 %409, %v61
    %v411 = vpop.permute.xlu0 %410
    %414 = vset.pattern.permute.xlu0 0
    %415 = vperm.xlu0 %414, %v62
    %v416 = vpop.permute.xlu0 %415
    %419 = vset.pattern.permute.xlu0 0
    %420 = vperm.xlu0 %419, %v63
    %v421 = vpop.permute.xlu0 %420
    %424 = vset.pattern.permute.xlu0 0
    %425 = vperm.xlu0 %424, %v64
    %v426 = vpop.permute.xlu0 %425
    %429 = vset.pattern.permute.xlu0 0
    %430 = vperm.xlu0 %429, %v65
    %v431 = vpop.permute.xlu0 %430
    %434 = vset.pattern.permute.xlu0 0
    %435 = vperm.xlu0 %434, %v66
    %v436 = vpop.permute.xlu0 %435
    %439 = vset.pattern.permute.xlu0 0
    %440 = vperm.xlu0 %439, %v67
    %v441 = vpop.permute.xlu0 %440
    %v443 = vmul.f32 %v387, %v406
    %v444 = vmul.f32 %v388, %v406
    %v445 = vmul.f32 %v389, %v411
    %v446 = vmul.f32 %v390, %v411
    %v447 = vmul.f32 %v391, %v416
    %v448 = vmul.f32 %v392, %v416
    %v449 = vmul.f32 %v393, %v421
    %v450 = vmul.f32 %v394, %v421
    %v451 = vmul.f32 %v395, %v426
    %v452 = vmul.f32 %v396, %v426
    %v453 = vmul.f32 %v397, %v431
    %v454 = vmul.f32 %v398, %v431
    %v455 = vmul.f32 %v399, %v436
    %v456 = vmul.f32 %v400, %v436
    %v457 = vmul.f32 %v401, %v441
    %v458 = vmul.f32 %v402, %v441
    %v459 = vadd.f32 %v443, %v445
    %v460 = vadd.f32 %v459, %v447
    %v461 = vadd.f32 %v460, %v449
    %v462 = vadd.f32 %v461, %v451
    %v463 = vadd.f32 %v462, %v453
    %v464 = vadd.f32 %v463, %v455
    %v465 = vadd.f32 %v464, %v457
    %v466 = vrot.slane %v465, 4
    %v467 = vadd.f32 %v465, %v466
    %v468 = vrot.slane %v467, 2
    %v469 = vadd.f32 %v467, %v468
    %v470 = vrot.slane %v469, 1
    %v471 = vadd.f32 %v469, %v470
    %v472 = vadd.f32 %v444, %v446
    %v473 = vadd.f32 %v472, %v448
    %v474 = vadd.f32 %v473, %v450
    %v475 = vadd.f32 %v474, %v452
    %v476 = vadd.f32 %v475, %v454
    %v477 = vadd.f32 %v476, %v456
    %v478 = vadd.f32 %v477, %v458
    %v479 = vrot.slane %v478, 4
    %v480 = vadd.f32 %v478, %v479
    %v481 = vrot.slane %v480, 2
    %v482 = vadd.f32 %v480, %v481
    %v483 = vrot.slane %v482, 1
    %v484 = vadd.f32 %v482, %v483
    %v485 = vstv %s68
    %v486 = vadd.f32 %v471, %v485
    %v487 = vadd.f32 %v484, %v485
    %v490 = vcombine.low %v486, %v487
    %v492 = vunpack.c.l.s4 1966171168
    %v493 = vunpack.c.0.s8 %v492
    %v494 = vlaneseq
    %v495 = vshrl.u32 %v494, 7
    %v496 = vsub.s32 %v493, %v495
    %v497 = vrot.slane %v490, %v496
    %v499 = vunpack.c.l.s4 1966171168
    %v500 = vunpack.c.0.s8 %v499
    %v501 = vlaneseq
    %v502 = vshrl.u32 %v501, 7
    %v503 = vsub.s32 %v500, %v502
    %v504 = vrot.slane %v497, %v503
    %v506 = vlaneseq
    %vm507 = vcmp.ge.s32.totalorder %v506, 0
    %vm508 = vcmp.lt.s32.totalorder %v506, 256
    %vm509 = vmand %vm507, %vm508
    %510 = vst.msk [vmem:[#allocation3] sm:$0x3] %vm509, %v504
    %s511 = scalar_lea.vmem %s0, 2
    %v512 = vld [vmem:[%s511] sm:$0x3]
    %v514 = vlaneseq
    %v515 = vshrl.u32 %v514, 7
    %v516 = vsub.s32 0, %v515
    %v517 = vrot.slane %v512, %v516
    %v518 = vlaneseq
    %v519 = vshrl.u32 %v518, 7
    %v520 = vsub.s32 1, %v519
    %v521 = vrot.slane %v512, %v520
    %v524 = vmul.f32 %v73, %v517
    %v525 = vmul.f32 %v73, %v521
    %v526 = vmul.f32 %v78, %v517
    %v527 = vmul.f32 %v78, %v521
    %v528 = vmul.f32 %v83, %v517
    %v529 = vmul.f32 %v83, %v521
    %v530 = vmul.f32 %v88, %v517
    %v531 = vmul.f32 %v88, %v521
    %v532 = vmul.f32 %v93, %v517
    %v533 = vmul.f32 %v93, %v521
    %v534 = vmul.f32 %v98, %v517
    %v535 = vmul.f32 %v98, %v521
    %v536 = vmul.f32 %v103, %v517
    %v537 = vmul.f32 %v103, %v521
    %v538 = vmul.f32 %v108, %v517
    %v539 = vmul.f32 %v108, %v521
    %v540 = vadd.f32 %v524, %v140
    %v541 = vadd.f32 %v525, %v140
    %v542 = vadd.f32 %v526, %v145
    %v543 = vadd.f32 %v527, %v145
    %v544 = vadd.f32 %v528, %v150
    %v545 = vadd.f32 %v529, %v150
    %v546 = vadd.f32 %v530, %v155
    %v547 = vadd.f32 %v531, %v155
    %v548 = vadd.f32 %v532, %v160
    %v549 = vadd.f32 %v533, %v160
    %v550 = vadd.f32 %v534, %v165
    %v551 = vadd.f32 %v535, %v165
    %v552 = vadd.f32 %v536, %v170
    %v553 = vadd.f32 %v537, %v170
    %v554 = vadd.f32 %v538, %v175
    %v555 = vadd.f32 %v539, %v175
    %v556 = vmax.f32 %v540, 0.0
    %v557 = vmax.f32 %v541, 0.0
    %v558 = vmax.f32 %v542, 0.0
    %v559 = vmax.f32 %v543, 0.0
    %v560 = vmax.f32 %v544, 0.0
    %v561 = vmax.f32 %v545, 0.0
    %v562 = vmax.f32 %v546, 0.0
    %v563 = vmax.f32 %v547, 0.0
    %v564 = vmax.f32 %v548, 0.0
    %v565 = vmax.f32 %v549, 0.0
    %v566 = vmax.f32 %v550, 0.0
    %v567 = vmax.f32 %v551, 0.0
    %v568 = vmax.f32 %v552, 0.0
    %v569 = vmax.f32 %v553, 0.0
    %v570 = vmax.f32 %v554, 0.0
    %v571 = vmax.f32 %v555, 0.0
    %572 = vmatprep.subr.mxu0 0.0
    %573 = vmatpush1.msra.mxu0 0.0
    %574 = vmatprep.subr.mxu0 0.0
    %575 = vmatpush1.msra.mxu0 0.0
    %576 = vmatprep.subr.mxu0 0.0
    %577 = vmatpush1.msra.mxu0 0.0
    %578 = vmatprep.subr.mxu0 0.0
    %579 = vmatpush1.msra.mxu0 0.0
    %580 = vmatprep.subr.mxu0 0.0
    %581 = vmatpush1.msra.mxu0 0.0
    %582 = vmatprep.subr.mxu0 0.0
    %583 = vmatpush1.msra.mxu0 0.0
    %584 = vmatprep.subr.mxu0 0.0
    %585 = vmatpush1.msra.mxu0 0.0
    %586 = vmatprep.subr.mxu0 0.0
    %587 = vmatpush1.msra.mxu0 0.0
    %588 = vmatprep.subr.mxu0 %v571
    %589 = vmatpush1.msra.mxu0 %v570
    %590 = vmatprep.subr.mxu0 %v569
    %591 = vmatpush1.msra.mxu0 %v568
    %592 = vmatprep.subr.mxu0 %v567
    %593 = vmatpush1.msra.mxu0 %v566
    %594 = vmatprep.subr.mxu0 %v565
    %595 = vmatpush1.msra.mxu0 %v564
    %596 = vmatprep.subr.mxu0 %v563
    %597 = vmatpush1.msra.mxu0 %v562
    %598 = vmatprep.subr.mxu0 %v561
    %599 = vmatpush1.msra.mxu0 %v560
    %600 = vmatprep.subr.mxu0 %v559
    %601 = vmatpush1.msra.mxu0 %v558
    %602 = vmatprep.subr.mxu0 %v557
    %603 = vmatpush1.msra.mxu0 %v556
    %604 = vmatprep.subr.mxu0 0.0
    %605 = vmatpush2.msra.mxu0 0.0
    %606 = vmatprep.subr.mxu0 0.0
    %607 = vmatpush2.msra.mxu0 0.0
    %608 = vmatprep.subr.mxu0 0.0
    %609 = vmatpush2.msra.mxu0 0.0
    %610 = vmatprep.subr.mxu0 0.0
    %611 = vmatpush2.msra.mxu0 0.0
    %612 = vmatprep.subr.mxu0 0.0
    %613 = vmatpush2.msra.mxu0 0.0
    %614 = vmatprep.subr.mxu0 0.0
    %615 = vmatpush2.msra.mxu0 0.0
    %616 = vmatprep.subr.mxu0 0.0
    %617 = vmatpush2.msra.mxu0 0.0
    %618 = vmatprep.subr.mxu0 0.0
    %619 = vmatpush2.msra.mxu0 0.0
    %620 = vmatprep.subr.mxu0 0.0
    %621 = vmatpush2.msra.mxu0 0.0
    %622 = vmatprep.subr.mxu0 0.0
    %623 = vmatpush2.msra.mxu0 0.0
    %624 = vmatprep.subr.mxu0 0.0
    %625 = vmatpush2.msra.mxu0 0.0
    %626 = vmatprep.subr.mxu0 0.0
    %627 = vmatpush2.msra.mxu0 0.0
    %628 = vmatprep.subr.mxu0 0.0
    %629 = vmatpush2.msra.mxu0 0.0
    %630 = vmatprep.subr.mxu0 0.0
    %631 = vmatpush2.msra.mxu0 0.0
    %632 = vmatprep.subr.mxu0 0.0
    %633 = vmatpush2.msra.mxu0 0.0
    %634 = vmatprep.subr.mxu0 0.0
    %635 = vmatpush2.msra.mxu0 0.0
    %636 = vmatprep.mubr.f32.mxu0 0.0
    %637 = vmatmul.mubr.f32.gmra.mxu0 %v251
    %v638 = vpop.f32.mrf.mxu0
    %v639 = vadd.f32 %v212, %v638
    %v640 = vpop.f32.mrf.mxu0
    %v641 = vadd.f32 %v212, %v640
    %642 = vmatprep.mubr.f32.mxu0 0.0
    %643 = vmatmul.mubr.f32.gmra.mxu0 %v254
    %v644 = vpop.f32.mrf.mxu0
    %v645 = vadd.f32 %v217, %v644
    %v646 = vpop.f32.mrf.mxu0
    %v647 = vadd.f32 %v217, %v646
    %648 = vmatprep.mubr.f32.mxu0 0.0
    %649 = vmatmul.mubr.f32.gmra.mxu0 %v257
    %v650 = vpop.f32.mrf.mxu0
    %v651 = vadd.f32 %v222, %v650
    %v652 = vpop.f32.mrf.mxu0
    %v653 = vadd.f32 %v222, %v652
    %654 = vmatprep.mubr.f32.mxu0 0.0
    %655 = vmatmul.mubr.f32.gmra.mxu0 %v260
    %v656 = vpop.f32.mrf.mxu0
    %v657 = vadd.f32 %v227, %v656
    %v658 = vpop.f32.mrf.mxu0
    %v659 = vadd.f32 %v227, %v658
    %660 = vmatprep.mubr.f32.mxu0 0.0
    %661 = vmatmul.mubr.f32.gmra.mxu0 %v263
    %v662 = vpop.f32.mrf.mxu0
    %v663 = vadd.f32 %v232, %v662
    %v664 = vpop.f32.mrf.mxu0
    %v665 = vadd.f32 %v232, %v664
    %666 = vmatprep.mubr.f32.mxu0 0.0
    %667 = vmatmul.mubr.f32.gmra.mxu0 %v266
    %v668 = vpop.f32.mrf.mxu0
    %v669 = vadd.f32 %v237, %v668
    %v670 = vpop.f32.mrf.mxu0
    %v671 = vadd.f32 %v237, %v670
    %672 = vmatprep.mubr.f32.mxu0 0.0
    %673 = vmatmul.mubr.f32.gmra.mxu0 %v269
    %v674 = vpop.f32.mrf.mxu0
    %v675 = vadd.f32 %v242, %v674
    %v676 = vpop.f32.mrf.mxu0
    %v677 = vadd.f32 %v242, %v676
    %678 = vmatprep.mubr.f32.mxu0 0.0
    %679 = vmatmul.mubr.f32.gmra.mxu0 %v272
    %v680 = vpop.f32.mrf.mxu0
    %v681 = vadd.f32 %v247, %v680
    %v682 = vpop.f32.mrf.mxu0
    %v683 = vadd.f32 %v247, %v682
    %684 = vdwg.mxu0
    %v685 = vmax.f32 %v639, 0.0
    %v686 = vmax.f32 %v641, 0.0
    %v687 = vmax.f32 %v645, 0.0
    %v688 = vmax.f32 %v647, 0.0
    %v689 = vmax.f32 %v651, 0.0
    %v690 = vmax.f32 %v653, 0.0
    %v691 = vmax.f32 %v657, 0.0
    %v692 = vmax.f32 %v659, 0.0
    %v693 = vmax.f32 %v663, 0.0
    %v694 = vmax.f32 %v665, 0.0
    %v695 = vmax.f32 %v669, 0.0
    %v696 = vmax.f32 %v671, 0.0
    %v697 = vmax.f32 %v675, 0.0
    %v698 = vmax.f32 %v677, 0.0
    %v699 = vmax.f32 %v681, 0.0
    %v700 = vmax.f32 %v683, 0.0
    %v701 = vmul.f32 %v685, %v406
    %v702 = vmul.f32 %v686, %v406
    %v703 = vmul.f32 %v687, %v411
    %v704 = vmul.f32 %v688, %v411
    %v705 = vmul.f32 %v689, %v416
    %v706 = vmul.f32 %v690, %v416
    %v707 = vmul.f32 %v691, %v421
    %v708 = vmul.f32 %v692, %v421
    %v709 = vmul.f32 %v693, %v426
    %v710 = vmul.f32 %v694, %v426
    %v711 = vmul.f32 %v695, %v431
    %v712 = vmul.f32 %v696, %v431
    %v713 = vmul.f32 %v697, %v436
    %v714 = vmul.f32 %v698, %v436
    %v715 = vmul.f32 %v699, %v441
    %v716 = vmul.f32 %v700, %v441
    %v717 = vadd.f32 %v701, %v703
    %v718 = vadd.f32 %v717, %v705
    %v719 = vadd.f32 %v718, %v707
    %v720 = vadd.f32 %v719, %v709
    %v721 = vadd.f32 %v720, %v711
    %v722 = vadd.f32 %v721, %v713
    %v723 = vadd.f32 %v722, %v715
    %v724 = vrot.slane %v723, 4
    %v725 = vadd.f32 %v723, %v724
    %v726 = vrot.slane %v725, 2
    %v727 = vadd.f32 %v725, %v726
    %v728 = vrot.slane %v727, 1
    %v729 = vadd.f32 %v727, %v728
    %v730 = vadd.f32 %v702, %v704
    %v731 = vadd.f32 %v730, %v706
    %v732 = vadd.f32 %v731, %v708
    %v733 = vadd.f32 %v732, %v710
    %v734 = vadd.f32 %v733, %v712
    %v735 = vadd.f32 %v734, %v714
    %v736 = vadd.f32 %v735, %v716
    %v737 = vrot.slane %v736, 4
    %v738 = vadd.f32 %v736, %v737
    %v739 = vrot.slane %v738, 2
    %v740 = vadd.f32 %v738, %v739
    %v741 = vrot.slane %v740, 1
    %v742 = vadd.f32 %v740, %v741
    %v743 = vadd.f32 %v729, %v485
    %v744 = vadd.f32 %v742, %v485
    %v747 = vcombine.low %v743, %v744
    %v749 = vunpack.c.l.s4 1966171168
    %v750 = vunpack.c.0.s8 %v749
    %v751 = vlaneseq
    %v752 = vshrl.u32 %v751, 7
    %v753 = vsub.s32 %v750, %v752
    %v754 = vrot.slane %v747, %v753
    %v756 = vunpack.c.l.s4 1966171168
    %v757 = vunpack.c.0.s8 %v756
    %v758 = vlaneseq
    %v759 = vshrl.u32 %v758, 7
    %v760 = vsub.s32 %v757, %v759
    %v761 = vrot.slane %v754, %v760
    %s763 = scalar_lea.vmem [#allocation3], 2
    %764 = vst.msk [vmem:[%s763] sm:$0x3] %vm509, %v761
    %s765 = scalar_lea.vmem %s0, 4
    %v766 = vld [vmem:[%s765] sm:$0x3]
    %v768 = vlaneseq
    %v769 = vshrl.u32 %v768, 7
    %v770 = vsub.s32 0, %v769
    %v771 = vrot.slane %v766, %v770
    %v772 = vlaneseq
    %v773 = vshrl.u32 %v772, 7
    %v774 = vsub.s32 1, %v773
    %v775 = vrot.slane %v766, %v774
    %v778 = vmul.f32 %v73, %v771
    %v779 = vmul.f32 %v73, %v775
    %v780 = vmul.f32 %v78, %v771
    %v781 = vmul.f32 %v78, %v775
    %v782 = vmul.f32 %v83, %v771
    %v783 = vmul.f32 %v83, %v775
    %v784 = vmul.f32 %v88, %v771
    %v785 = vmul.f32 %v88, %v775
    %v786 = vmul.f32 %v93, %v771
    %v787 = vmul.f32 %v93, %v775
    %v788 = vmul.f32 %v98, %v771
    %v789 = vmul.f32 %v98, %v775
    %v790 = vmul.f32 %v103, %v771
    %v791 = vmul.f32 %v103, %v775
    %v792 = vmul.f32 %v108, %v771
    %v793 = vmul.f32 %v108, %v775
    %v794 = vadd.f32 %v778, %v140
    %v795 = vadd.f32 %v779, %v140
    %v796 = vadd.f32 %v780, %v145
    %v797 = vadd.f32 %v781, %v145
    %v798 = vadd.f32 %v782, %v150
    %v799 = vadd.f32 %v783, %v150
    %v800 = vadd.f32 %v784, %v155
    %v801 = vadd.f32 %v785, %v155
    %v802 = vadd.f32 %v786, %v160
    %v803 = vadd.f32 %v787, %v160
    %v804 = vadd.f32 %v788, %v165
    %v805 = vadd.f32 %v789, %v165
    %v806 = vadd.f32 %v790, %v170
    %v807 = vadd.f32 %v791, %v170
    %v808 = vadd.f32 %v792, %v175
    %v809 = vadd.f32 %v793, %v175
    %v810 = vmax.f32 %v794, 0.0
    %v811 = vmax.f32 %v795, 0.0
    %v812 = vmax.f32 %v796, 0.0
    %v813 = vmax.f32 %v797, 0.0
    %v814 = vmax.f32 %v798, 0.0
    %v815 = vmax.f32 %v799, 0.0
    %v816 = vmax.f32 %v800, 0.0
    %v817 = vmax.f32 %v801, 0.0
    %v818 = vmax.f32 %v802, 0.0
    %v819 = vmax.f32 %v803, 0.0
    %v820 = vmax.f32 %v804, 0.0
    %v821 = vmax.f32 %v805, 0.0
    %v822 = vmax.f32 %v806, 0.0
    %v823 = vmax.f32 %v807, 0.0
    %v824 = vmax.f32 %v808, 0.0
    %v825 = vmax.f32 %v809, 0.0
    %826 = vmatprep.subr.mxu0 0.0
    %827 = vmatpush1.msra.mxu0 0.0
    %828 = vmatprep.subr.mxu0 0.0
    %829 = vmatpush1.msra.mxu0 0.0
    %830 = vmatprep.subr.mxu0 0.0
    %831 = vmatpush1.msra.mxu0 0.0
    %832 = vmatprep.subr.mxu0 0.0
    %833 = vmatpush1.msra.mxu0 0.0
    %834 = vmatprep.subr.mxu0 0.0
    %835 = vmatpush1.msra.mxu0 0.0
    %836 = vmatprep.subr.mxu0 0.0
    %837 = vmatpush1.msra.mxu0 0.0
    %838 = vmatprep.subr.mxu0 0.0
    %839 = vmatpush1.msra.mxu0 0.0
    %840 = vmatprep.subr.mxu0 0.0
    %841 = vmatpush1.msra.mxu0 0.0
    %842 = vmatprep.subr.mxu0 %v825
    %843 = vmatpush1.msra.mxu0 %v824
    %844 = vmatprep.subr.mxu0 %v823
    %845 = vmatpush1.msra.mxu0 %v822
    %846 = vmatprep.subr.mxu0 %v821
    %847 = vmatpush1.msra.mxu0 %v820
    %848 = vmatprep.subr.mxu0 %v819
    %849 = vmatpush1.msra.mxu0 %v818
    %850 = vmatprep.subr.mxu0 %v817
    %851 = vmatpush1.msra.mxu0 %v816
    %852 = vmatprep.subr.mxu0 %v815
    %853 = vmatpush1.msra.mxu0 %v814
    %854 = vmatprep.subr.mxu0 %v813
    %855 = vmatpush1.msra.mxu0 %v812
    %856 = vmatprep.subr.mxu0 %v811
    %857 = vmatpush1.msra.mxu0 %v810
    %858 = vmatprep.subr.mxu0 0.0
    %859 = vmatpush2.msra.mxu0 0.0
    %860 = vmatprep.subr.mxu0 0.0
    %861 = vmatpush2.msra.mxu0 0.0
    %862 = vmatprep.subr.mxu0 0.0
    %863 = vmatpush2.msra.mxu0 0.0
    %864 = vmatprep.subr.mxu0 0.0
    %865 = vmatpush2.msra.mxu0 0.0
    %866 = vmatprep.subr.mxu0 0.0
    %867 = vmatpush2.msra.mxu0 0.0
    %868 = vmatprep.subr.mxu0 0.0
    %869 = vmatpush2.msra.mxu0 0.0
    %870 = vmatprep.subr.mxu0 0.0
    %871 = vmatpush2.msra.mxu0 0.0
    %872 = vmatprep.subr.mxu0 0.0
    %873 = vmatpush2.msra.mxu0 0.0
    %874 = vmatprep.subr.mxu0 0.0
    %875 = vmatpush2.msra.mxu0 0.0
    %876 = vmatprep.subr.mxu0 0.0
    %877 = vmatpush2.msra.mxu0 0.0
    %878 = vmatprep.subr.mxu0 0.0
    %879 = vmatpush2.msra.mxu0 0.0
    %880 = vmatprep.subr.mxu0 0.0
    %881 = vmatpush2.msra.mxu0 0.0
    %882 = vmatprep.subr.mxu0 0.0
    %883 = vmatpush2.msra.mxu0 0.0
    %884 = vmatprep.subr.mxu0 0.0
    %885 = vmatpush2.msra.mxu0 0.0
    %886 = vmatprep.subr.mxu0 0.0
    %887 = vmatpush2.msra.mxu0 0.0
    %888 = vmatprep.subr.mxu0 0.0
    %889 = vmatpush2.msra.mxu0 0.0
    %890 = vmatprep.mubr.f32.mxu0 0.0
    %891 = vmatmul.mubr.f32.gmra.mxu0 %v251
    %v892 = vpop.f32.mrf.mxu0
    %v893 = vadd.f32 %v212, %v892
    %v894 = vpop.f32.mrf.mxu0
    %v895 = vadd.f32 %v212, %v894
    %896 = vmatprep.mubr.f32.mxu0 0.0
    %897 = vmatmul.mubr.f32.gmra.mxu0 %v254
    %v898 = vpop.f32.mrf.mxu0
    %v899 = vadd.f32 %v217, %v898
    %v900 = vpop.f32.mrf.mxu0
    %v901 = vadd.f32 %v217, %v900
    %902 = vmatprep.mubr.f32.mxu0 0.0
    %903 = vmatmul.mubr.f32.gmra.mxu0 %v257
    %v904 = vpop.f32.mrf.mxu0
    %v905 = vadd.f32 %v222, %v904
    %v906 = vpop.f32.mrf.mxu0
    %v907 = vadd.f32 %v222, %v906
    %908 = vmatprep.mubr.f32.mxu0 0.0
    %909 = vmatmul.mubr.f32.gmra.mxu0 %v260
    %v910 = vpop.f32.mrf.mxu0
    %v911 = vadd.f32 %v227, %v910
    %v912 = vpop.f32.mrf.mxu0
    %v913 = vadd.f32 %v227, %v912
    %914 = vmatprep.mubr.f32.mxu0 0.0
    %915 = vmatmul.mubr.f32.gmra.mxu0 %v263
    %v916 = vpop.f32.mrf.mxu0
    %v917 = vadd.f32 %v232, %v916
    %v918 = vpop.f32.mrf.mxu0
    %v919 = vadd.f32 %v232, %v918
    %920 = vmatprep.mubr.f32.mxu0 0.0
    %921 = vmatmul.mubr.f32.gmra.mxu0 %v266
    %v922 = vpop.f32.mrf.mxu0
    %v923 = vadd.f32 %v237, %v922
    %v924 = vpop.f32.mrf.mxu0
    %v925 = vadd.f32 %v237, %v924
    %926 = vmatprep.mubr.f32.mxu0 0.0
    %927 = vmatmul.mubr.f32.gmra.mxu0 %v269
    %v928 = vpop.f32.mrf.mxu0
    %v929 = vadd.f32 %v242, %v928
    %v930 = vpop.f32.mrf.mxu0
    %v931 = vadd.f32 %v242, %v930
    %932 = vmatprep.mubr.f32.mxu0 0.0
    %933 = vmatmul.mubr.f32.gmra.mxu0 %v272
    %v934 = vpop.f32.mrf.mxu0
    %v935 = vadd.f32 %v247, %v934
    %v936 = vpop.f32.mrf.mxu0
    %v937 = vadd.f32 %v247, %v936
    %938 = vdwg.mxu0
    %v939 = vmax.f32 %v893, 0.0
    %v940 = vmax.f32 %v895, 0.0
    %v941 = vmax.f32 %v899, 0.0
    %v942 = vmax.f32 %v901, 0.0
    %v943 = vmax.f32 %v905, 0.0
    %v944 = vmax.f32 %v907, 0.0
    %v945 = vmax.f32 %v911, 0.0
    %v946 = vmax.f32 %v913, 0.0
    %v947 = vmax.f32 %v917, 0.0
    %v948 = vmax.f32 %v919, 0.0
    %v949 = vmax.f32 %v923, 0.0
    %v950 = vmax.f32 %v925, 0.0
    %v951 = vmax.f32 %v929, 0.0
    %v952 = vmax.f32 %v931, 0.0
    %v953 = vmax.f32 %v935, 0.0
    %v954 = vmax.f32 %v937, 0.0
    %v955 = vmul.f32 %v939, %v406
    %v956 = vmul.f32 %v940, %v406
    %v957 = vmul.f32 %v941, %v411
    %v958 = vmul.f32 %v942, %v411
    %v959 = vmul.f32 %v943, %v416
    %v960 = vmul.f32 %v944, %v416
    %v961 = vmul.f32 %v945, %v421
    %v962 = vmul.f32 %v946, %v421
    %v963 = vmul.f32 %v947, %v426
    %v964 = vmul.f32 %v948, %v426
    %v965 = vmul.f32 %v949, %v431
    %v966 = vmul.f32 %v950, %v431
    %v967 = vmul.f32 %v951, %v436
    %v968 = vmul.f32 %v952, %v436
    %v969 = vmul.f32 %v953, %v441
    %v970 = vmul.f32 %v954, %v441
    %v971 = vadd.f32 %v955, %v957
    %v972 = vadd.f32 %v971, %v959
    %v973 = vadd.f32 %v972, %v961
    %v974 = vadd.f32 %v973, %v963
    %v975 = vadd.f32 %v974, %v965
    %v976 = vadd.f32 %v975, %v967
    %v977 = vadd.f32 %v976, %v969
    %v978 = vrot.slane %v977, 4
    %v979 = vadd.f32 %v977, %v978
    %v980 = vrot.slane %v979, 2
    %v981 = vadd.f32 %v979, %v980
    %v982 = vrot.slane %v981, 1
    %v983 = vadd.f32 %v981, %v982
    %v984 = vadd.f32 %v956, %v958
    %v985 = vadd.f32 %v984, %v960
    %v986 = vadd.f32 %v985, %v962
    %v987 = vadd.f32 %v986, %v964
    %v988 = vadd.f32 %v987, %v966
    %v989 = vadd.f32 %v988, %v968
    %v990 = vadd.f32 %v989, %v970
    %v991 = vrot.slane %v990, 4
    %v992 = vadd.f32 %v990, %v991
    %v993 = vrot.slane %v992, 2
    %v994 = vadd.f32 %v992, %v993
    %v995 = vrot.slane %v994, 1
    %v996 = vadd.f32 %v994, %v995
    %v997 = vadd.f32 %v983, %v485
    %v998 = vadd.f32 %v996, %v485
    %v1001 = vcombine.low %v997, %v998
    %v1003 = vunpack.c.l.s4 1966171168
    %v1004 = vunpack.c.0.s8 %v1003
    %v1005 = vlaneseq
    %v1006 = vshrl.u32 %v1005, 7
    %v1007 = vsub.s32 %v1004, %v1006
    %v1008 = vrot.slane %v1001, %v1007
    %v1010 = vunpack.c.l.s4 1966171168
    %v1011 = vunpack.c.0.s8 %v1010
    %v1012 = vlaneseq
    %v1013 = vshrl.u32 %v1012, 7
    %v1014 = vsub.s32 %v1011, %v1013
    %v1015 = vrot.slane %v1008, %v1014
    %s1017 = scalar_lea.vmem [#allocation3], 4
    %1018 = vst.msk [vmem:[%s1017] sm:$0x3] %vm509, %v1015
    %s1019 = scalar_lea.vmem %s0, 6
    %v1020 = vld [vmem:[%s1019] sm:$0x3]
    %v1022 = vlaneseq
    %v1023 = vshrl.u32 %v1022, 7
    %v1024 = vsub.s32 0, %v1023
    %v1025 = vrot.slane %v1020, %v1024
    %v1026 = vlaneseq
    %v1027 = vshrl.u32 %v1026, 7
    %v1028 = vsub.s32 1, %v1027
    %v1029 = vrot.slane %v1020, %v1028
    %v1032 = vmul.f32 %v73, %v1025
    %v1033 = vmul.f32 %v73, %v1029
    %v1034 = vmul.f32 %v78, %v1025
    %v1035 = vmul.f32 %v78, %v1029
    %v1036 = vmul.f32 %v83, %v1025
    %v1037 = vmul.f32 %v83, %v1029
    %v1038 = vmul.f32 %v88, %v1025
    %v1039 = vmul.f32 %v88, %v1029
    %v1040 = vmul.f32 %v93, %v1025
    %v1041 = vmul.f32 %v93, %v1029
    %v1042 = vmul.f32 %v98, %v1025
    %v1043 = vmul.f32 %v98, %v1029
    %v1044 = vmul.f32 %v103, %v1025
    %v1045 = vmul.f32 %v103, %v1029
    %v1046 = vmul.f32 %v108, %v1025
    %v1047 = vmul.f32 %v108, %v1029
    %v1048 = vadd.f32 %v1032, %v140
    %v1049 = vadd.f32 %v1033, %v140
    %v1050 = vadd.f32 %v1034, %v145
    %v1051 = vadd.f32 %v1035, %v145
    %v1052 = vadd.f32 %v1036, %v150
    %v1053 = vadd.f32 %v1037, %v150
    %v1054 = vadd.f32 %v1038, %v155
    %v1055 = vadd.f32 %v1039, %v155
    %v1056 = vadd.f32 %v1040, %v160
    %v1057 = vadd.f32 %v1041, %v160
    %v1058 = vadd.f32 %v1042, %v165
    %v1059 = vadd.f32 %v1043, %v165
    %v1060 = vadd.f32 %v1044, %v170
    %v1061 = vadd.f32 %v1045, %v170
    %v1062 = vadd.f32 %v1046, %v175
    %v1063 = vadd.f32 %v1047, %v175
    %v1064 = vmax.f32 %v1048, 0.0
    %v1065 = vmax.f32 %v1049, 0.0
    %v1066 = vmax.f32 %v1050, 0.0
    %v1067 = vmax.f32 %v1051, 0.0
    %v1068 = vmax.f32 %v1052, 0.0
    %v1069 = vmax.f32 %v1053, 0.0
    %v1070 = vmax.f32 %v1054, 0.0
    %v1071 = vmax.f32 %v1055, 0.0
    %v1072 = vmax.f32 %v1056, 0.0
    %v1073 = vmax.f32 %v1057, 0.0
    %v1074 = vmax.f32 %v1058, 0.0
    %v1075 = vmax.f32 %v1059, 0.0
    %v1076 = vmax.f32 %v1060, 0.0
    %v1077 = vmax.f32 %v1061, 0.0
    %v1078 = vmax.f32 %v1062, 0.0
    %v1079 = vmax.f32 %v1063, 0.0
    %1080 = vmatprep.subr.mxu0 0.0
    %1081 = vmatpush1.msra.mxu0 0.0
    %1082 = vmatprep.subr.mxu0 0.0
    %1083 = vmatpush1.msra.mxu0 0.0
    %1084 = vmatprep.subr.mxu0 0.0
    %1085 = vmatpush1.msra.mxu0 0.0
    %1086 = vmatprep.subr.mxu0 0.0
    %1087 = vmatpush1.msra.mxu0 0.0
    %1088 = vmatprep.subr.mxu0 0.0
    %1089 = vmatpush1.msra.mxu0 0.0
    %1090 = vmatprep.subr.mxu0 0.0
    %1091 = vmatpush1.msra.mxu0 0.0
    %1092 = vmatprep.subr.mxu0 0.0
    %1093 = vmatpush1.msra.mxu0 0.0
    %1094 = vmatprep.subr.mxu0 0.0
    %1095 = vmatpush1.msra.mxu0 0.0
    %1096 = vmatprep.subr.mxu0 %v1079
    %1097 = vmatpush1.msra.mxu0 %v1078
    %1098 = vmatprep.subr.mxu0 %v1077
    %1099 = vmatpush1.msra.mxu0 %v1076
    %1100 = vmatprep.subr.mxu0 %v1075
    %1101 = vmatpush1.msra.mxu0 %v1074
    %1102 = vmatprep.subr.mxu0 %v1073
    %1103 = vmatpush1.msra.mxu0 %v1072
    %1104 = vmatprep.subr.mxu0 %v1071
    %1105 = vmatpush1.msra.mxu0 %v1070
    %1106 = vmatprep.subr.mxu0 %v1069
    %1107 = vmatpush1.msra.mxu0 %v1068
    %1108 = vmatprep.subr.mxu0 %v1067
    %1109 = vmatpush1.msra.mxu0 %v1066
    %1110 = vmatprep.subr.mxu0 %v1065
    %1111 = vmatpush1.msra.mxu0 %v1064
    %1112 = vmatprep.subr.mxu0 0.0
    %1113 = vmatpush2.msra.mxu0 0.0
    %1114 = vmatprep.subr.mxu0 0.0
    %1115 = vmatpush2.msra.mxu0 0.0
    %1116 = vmatprep.subr.mxu0 0.0
    %1117 = vmatpush2.msra.mxu0 0.0
    %1118 = vmatprep.subr.mxu0 0.0
    %1119 = vmatpush2.msra.mxu0 0.0
    %1120 = vmatprep.subr.mxu0 0.0
    %1121 = vmatpush2.msra.mxu0 0.0
    %1122 = vmatprep.subr.mxu0 0.0
    %1123 = vmatpush2.msra.mxu0 0.0
    %1124 = vmatprep.subr.mxu0 0.0
    %1125 = vmatpush2.msra.mxu0 0.0
    %1126 = vmatprep.subr.mxu0 0.0
    %1127 = vmatpush2.msra.mxu0 0.0
    %1128 = vmatprep.subr.mxu0 0.0
    %1129 = vmatpush2.msra.mxu0 0.0
    %1130 = vmatprep.subr.mxu0 0.0
    %1131 = vmatpush2.msra.mxu0 0.0
    %1132 = vmatprep.subr.mxu0 0.0
    %1133 = vmatpush2.msra.mxu0 0.0
    %1134 = vmatprep.subr.mxu0 0.0
    %1135 = vmatpush2.msra.mxu0 0.0
    %1136 = vmatprep.subr.mxu0 0.0
    %1137 = vmatpush2.msra.mxu0 0.0
    %1138 = vmatprep.subr.mxu0 0.0
    %1139 = vmatpush2.msra.mxu0 0.0
    %1140 = vmatprep.subr.mxu0 0.0
    %1141 = vmatpush2.msra.mxu0 0.0
    %1142 = vmatprep.subr.mxu0 0.0
    %1143 = vmatpush2.msra.mxu0 0.0
    %1144 = vmatprep.mubr.f32.mxu0 0.0
    %1145 = vmatmul.mubr.f32.gmra.mxu0 %v251
    %v1146 = vpop.f32.mrf.mxu0
    %v1147 = vadd.f32 %v212, %v1146
    %v1148 = vpop.f32.mrf.mxu0
    %v1149 = vadd.f32 %v212, %v1148
    %1150 = vmatprep.mubr.f32.mxu0 0.0
    %1151 = vmatmul.mubr.f32.gmra.mxu0 %v254
    %v1152 = vpop.f32.mrf.mxu0
    %v1153 = vadd.f32 %v217, %v1152
    %v1154 = vpop.f32.mrf.mxu0
    %v1155 = vadd.f32 %v217, %v1154
    %1156 = vmatprep.mubr.f32.mxu0 0.0
    %1157 = vmatmul.mubr.f32.gmra.mxu0 %v257
    %v1158 = vpop.f32.mrf.mxu0
    %v1159 = vadd.f32 %v222, %v1158
    %v1160 = vpop.f32.mrf.mxu0
    %v1161 = vadd.f32 %v222, %v1160
    %1162 = vmatprep.mubr.f32.mxu0 0.0
    %1163 = vmatmul.mubr.f32.gmra.mxu0 %v260
    %v1164 = vpop.f32.mrf.mxu0
    %v1165 = vadd.f32 %v227, %v1164
    %v1166 = vpop.f32.mrf.mxu0
    %v1167 = vadd.f32 %v227, %v1166
    %1168 = vmatprep.mubr.f32.mxu0 0.0
    %1169 = vmatmul.mubr.f32.gmra.mxu0 %v263
    %v1170 = vpop.f32.mrf.mxu0
    %v1171 = vadd.f32 %v232, %v1170
    %v1172 = vpop.f32.mrf.mxu0
    %v1173 = vadd.f32 %v232, %v1172
    %1174 = vmatprep.mubr.f32.mxu0 0.0
    %1175 = vmatmul.mubr.f32.gmra.mxu0 %v266
    %v1176 = vpop.f32.mrf.mxu0
    %v1177 = vadd.f32 %v237, %v1176
    %v1178 = vpop.f32.mrf.mxu0
    %v1179 = vadd.f32 %v237, %v1178
    %1180 = vmatprep.mubr.f32.mxu0 0.0
    %1181 = vmatmul.mubr.f32.gmra.mxu0 %v269
    %v1182 = vpop.f32.mrf.mxu0
    %v1183 = vadd.f32 %v242, %v1182
    %v1184 = vpop.f32.mrf.mxu0
    %v1185 = vadd.f32 %v242, %v1184
    %1186 = vmatprep.mubr.f32.mxu0 0.0
    %1187 = vmatmul.mubr.f32.gmra.mxu0 %v272
    %v1188 = vpop.f32.mrf.mxu0
    %v1189 = vadd.f32 %v247, %v1188
    %v1190 = vpop.f32.mrf.mxu0
    %v1191 = vadd.f32 %v247, %v1190
    %1192 = vdwg.mxu0
    %v1193 = vmax.f32 %v1147, 0.0
    %v1194 = vmax.f32 %v1149, 0.0
    %v1195 = vmax.f32 %v1153, 0.0
    %v1196 = vmax.f32 %v1155, 0.0
    %v1197 = vmax.f32 %v1159, 0.0
    %v1198 = vmax.f32 %v1161, 0.0
    %v1199 = vmax.f32 %v1165, 0.0
    %v1200 = vmax.f32 %v1167, 0.0
    %v1201 = vmax.f32 %v1171, 0.0
    %v1202 = vmax.f32 %v1173, 0.0
    %v1203 = vmax.f32 %v1177, 0.0
    %v1204 = vmax.f32 %v1179, 0.0
    %v1205 = vmax.f32 %v1183, 0.0
    %v1206 = vmax.f32 %v1185, 0.0
    %v1207 = vmax.f32 %v1189, 0.0
    %v1208 = vmax.f32 %v1191, 0.0
    %v1209 = vmul.f32 %v1193, %v406
    %v1210 = vmul.f32 %v1194, %v406
    %v1211 = vmul.f32 %v1195, %v411
    %v1212 = vmul.f32 %v1196, %v411
    %v1213 = vmul.f32 %v1197, %v416
    %v1214 = vmul.f32 %v1198, %v416
    %v1215 = vmul.f32 %v1199, %v421
    %v1216 = vmul.f32 %v1200, %v421
    %v1217 = vmul.f32 %v1201, %v426
    %v1218 = vmul.f32 %v1202, %v426
    %v1219 = vmul.f32 %v1203, %v431
    %v1220 = vmul.f32 %v1204, %v431
    %v1221 = vmul.f32 %v1205, %v436
    %v1222 = vmul.f32 %v1206, %v436
    %v1223 = vmul.f32 %v1207, %v441
    %v1224 = vmul.f32 %v1208, %v441
    %v1225 = vadd.f32 %v1209, %v1211
    %v1226 = vadd.f32 %v1225, %v1213
    %v1227 = vadd.f32 %v1226, %v1215
    %v1228 = vadd.f32 %v1227, %v1217
    %v1229 = vadd.f32 %v1228, %v1219
    %v1230 = vadd.f32 %v1229, %v1221
    %v1231 = vadd.f32 %v1230, %v1223
    %v1232 = vrot.slane %v1231, 4
    %v1233 = vadd.f32 %v1231, %v1232
    %v1234 = vrot.slane %v1233, 2
    %v1235 = vadd.f32 %v1233, %v1234
    %v1236 = vrot.slane %v1235, 1
    %v1237 = vadd.f32 %v1235, %v1236
    %v1238 = vadd.f32 %v1210, %v1212
    %v1239 = vadd.f32 %v1238, %v1214
    %v1240 = vadd.f32 %v1239, %v1216
    %v1241 = vadd.f32 %v1240, %v1218
    %v1242 = vadd.f32 %v1241, %v1220
    %v1243 = vadd.f32 %v1242, %v1222
    %v1244 = vadd.f32 %v1243, %v1224
    %v1245 = vrot.slane %v1244, 4
    %v1246 = vadd.f32 %v1244, %v1245
    %v1247 = vrot.slane %v1246, 2
    %v1248 = vadd.f32 %v1246, %v1247
    %v1249 = vrot.slane %v1248, 1
    %v1250 = vadd.f32 %v1248, %v1249
    %v1251 = vadd.f32 %v1237, %v485
    %v1252 = vadd.f32 %v1250, %v485
    %v1255 = vcombine.low %v1251, %v1252
    %v1257 = vunpack.c.l.s4 1966171168
    %v1258 = vunpack.c.0.s8 %v1257
    %v1259 = vlaneseq
    %v1260 = vshrl.u32 %v1259, 7
    %v1261 = vsub.s32 %v1258, %v1260
    %v1262 = vrot.slane %v1255, %v1261
    %v1264 = vunpack.c.l.s4 1966171168
    %v1265 = vunpack.c.0.s8 %v1264
    %v1266 = vlaneseq
    %v1267 = vshrl.u32 %v1266, 7
    %v1268 = vsub.s32 %v1265, %v1267
    %v1269 = vrot.slane %v1262, %v1268
    %s1271 = scalar_lea.vmem [#allocation3], 6
    %1272 = vst.msk [vmem:[%s1271] sm:$0x3] %vm509, %v1269
    // Predicated region
    $region30: #{polinomio_forward.1} parent=1 // pred_check
      _
    $region31: #{polinomio_forward.1} parent=1 // pred_check_branch
      %1274 = sbr.rel (0) target = $region33
    $region32: #{polinomio_forward.1} parent=1 // pred_region
      %s1276 = ssub.s32 128, 128
      %1277 = vsyncadd [#allocation4], %s1276
      %s1279 = sshll.u32 [#allocation3], 4
      %s1280 = int_to_ptr.vmem [resolvable:$true] %s1279
      %1282 = dma.vmem_to_hbm [thread:$0]  %s1280, 128, %s7, [#allocation4]
    $region33: #{polinomio_forward.1} parent=1 // pred_fallthru
      _
    // Predicated region
    $region34: #{polinomio_forward.1} parent=1 // pred_check
      _
    $region35: #{polinomio_forward.1} parent=1 // pred_check_branch
      %1284 = sbr.rel (0) target = $region37
    $region36: #{polinomio_forward.1} parent=1 // pred_region
      %1285 = dma.done [#allocation4], 128
    $region37: #{polinomio_forward.1} parent=1 // pred_fallthru
      _
    %1286 = vsyncpa [#allocation4], 1

</llo_original>
